<compile_context>
chip_gen: v7x
topology: tpu7x:2x2x1
jax: 0.10.0
libtpu: 0.0.40
codegen_flags: <defaults>
</compile_context>

<pallas_src>
import jax
import jax.numpy as jnp
from jax.experimental import pallas as pl
from jax.experimental.pallas import tpu as pltpu

LN_EPS = 1e-5  # torch.nn.LayerNorm default


def _round_up(x: int, m: int) -> int:
    return (x + m - 1) // m * m


def _make_encoder_head_kernel(t_valid: int, t_padded: int,
                              s_total: int, t_s: int, need_s_mask: bool):
    """t_valid=real num_targets, t_padded=lane-padded, s_total=real seq len."""
    need_t_mask = t_valid != t_padded
    inv_t = 1.0 / float(t_valid)

    def kernel(x_ref, w_ref, b_ref, o_ref, acc_ref):
        # x_ref:   [tB, tS, H]  hidden-state tile (streamed in its own dtype)
        # w_ref:   [H, Tp]      W_0 weight (grid-invariant, VMEM-resident)
        # b_ref:   [1, Tp]      W_0 bias   (grid-invariant)
        # o_ref:   [tB, Tp]     output tile (f32)
        # acc_ref: [tB, H]      f32 running max over the sequence axis
        s = pl.program_id(1)

        @pl.when(s == 0)
        def _():
            acc_ref[...] = jnp.full(acc_ref.shape, -jnp.inf, acc_ref.dtype)

        x = x_ref[...]                                            # [tB, tS, H]
        if need_s_mask:
            # Ragged last S tile handled in-kernel (no HBM padding copies):
            # OOB rows are neutralized with -inf before the max.
            seq = s * t_s + jax.lax.broadcasted_iota(jnp.int32, x.shape, 1)
            x = jnp.where(seq < s_total, x, -jnp.inf)
        tile_max = jnp.max(x, axis=1)                             # [tB, H]
        acc_ref[...] = jnp.maximum(acc_ref[...], tile_max.astype(jnp.float32))

        @pl.when(s == pl.num_programs(1) - 1)
        def _():
            pooled = acc_ref[...]                                 # [tB, H] f32
            # Matmul in the weight's dtype (bf16 weights -> native MXU rate);
            # accumulate in f32.
            y = jnp.dot(pooled.astype(w_ref.dtype), w_ref[...],
                        preferred_element_type=jnp.float32)       # [tB, Tp]
            y = y + b_ref[...].astype(jnp.float32)

            if need_t_mask:
                # LayerNorm statistics over valid targets only.
                lane = jax.lax.broadcasted_iota(jnp.int32, y.shape, 1)
                valid = lane < t_valid
                y_v = jnp.where(valid, y, 0.0)
                mean = jnp.sum(y_v, axis=-1, keepdims=True) * inv_t
                centered = jnp.where(valid, y - mean, 0.0)
                var = jnp.sum(centered * centered, axis=-1, keepdims=True) * inv_t
            else:
                mean = jnp.mean(y, axis=-1, keepdims=True)
                centered = y - mean
                var = jnp.mean(centered * centered, axis=-1, keepdims=True)

            o_ref[...] = (centered * jax.lax.rsqrt(var + LN_EPS)).astype(o_ref.dtype)

    return kernel


def transformer_encoder_head(hidden_states, w0, b0, *, target_tile_bytes=None):
    """Fused max-pool (seq) + Linear + non-affine LayerNorm.

    hidden_states: [B, S, H] (f32 or bf16 — streamed as-is); w0: [H, T]; b0: [T].
    Returns [B, T] float32.
    """
    B, S, H = hidden_states.shape
    H2, T = w0.shape
    assert H == H2, "W_0 in_features must match hidden size"

    x = hidden_states                       # no wrapper-side cast / padding of x
    dtype_bytes = jnp.dtype(x.dtype).itemsize
    sub = max(8, 32 // dtype_bytes)         # packed sublane multiple: 8/16/32

    # --- generation-aware VMEM budget ---------------------------------------
    try:
        vmem_cap = int(pltpu.get_tpu_info().vmem_capacity_bytes)
    except Exception:
        vmem_cap = 64 << 20                 # v7x per-TC floor (conservative)
    if target_tile_bytes is None:
        # v5e/v6e (128 MiB): bigger blocks shave per-step overhead; v7x: keep
        # blocks <= ~6 MiB so 2x x-block + weights + scratch stays << 64 MiB.
        target_tile_bytes = (8 << 20) if vmem_cap >= (96 << 20) else (6 << 20)
    budget = int(vmem_cap * 3 // 4)

    # --- tile selection ------------------------------------------------------
    # Batch tile: multiple of 8 (or full B when B<=8), capped at 64, and kept
    # small enough that grid[0] >= 2 so the "parallel" B axis can split across
    # both v7x TensorCores.
    # TODO(synk): evaluate pltpu.CORE_PARALLEL / explicit core_map on v7x.
    if B <= 8:
        tB = B
    else:
        tB = min(64, _round_up((B + 1) // 2, 8))
    nB = pl.cdiv(B, tB)

    # Sequence tile: multiple of `sub`, sized so one x block ~ target bytes.
    rows = max(sub, target_tile_bytes // max(1, tB * H * dtype_bytes))
    tS = max(sub, min(_round_up(S, sub), (rows // sub) * sub))

    # Lane-dense targets (weight/bias pads are tiny; x is never padded).
    Tp = _round_up(T, 128)
    if Tp != T:
        w0 = jnp.pad(w0, ((0, 0), (0, Tp - T)))
        b0 = jnp.pad(b0, (0, Tp - T))
    b0_2d = b0.reshape(1, Tp)
    w_bytes = H * Tp * jnp.dtype(w0.dtype).itemsize

    # Shrink tS if the double-buffered footprint would blow the VMEM budget.
    fixed = 2 * w_bytes + 2 * Tp * 4 + 2 * tB * Tp * 4 + tB * H * 4 + (4 << 20)
    while 2 * tB * tS * H * dtype_bytes + fixed > budget and tS > sub:
        tS = max(sub, (tS // 2) // sub * sub)
    req = 2 * tB * tS * H * dtype_bytes + fixed
    vmem_limit = int(min(max(req, 32 << 20), budget))

    nS = pl.cdiv(S, tS)
    grid = (nB, nS)

    cost = pl.CostEstimate(
        flops=int(2 * B * H * Tp + B * S * H),
        transcendentals=int(B),
        bytes_accessed=int(B * S * H * dtype_bytes + w_bytes + B * Tp * 4),
    )

    out_padded = pl.pallas_call(
        _make_encoder_head_kernel(T, Tp, S, tS, (S % tS) != 0),
        out_shape=jax.ShapeDtypeStruct((B, Tp), jnp.float32),
        grid_spec=pltpu.PrefetchScalarGridSpec(
            num_scalar_prefetch=0,
            grid=grid,
            in_specs=[
                pl.BlockSpec((tB, tS, H), lambda b, s: (b, s, 0)),
                pl.BlockSpec((H, Tp), lambda b, s: (0, 0)),    # grid-invariant
                pl.BlockSpec((1, Tp), lambda b, s: (0, 0)),    # grid-invariant
            ],
            out_specs=pl.BlockSpec((tB, Tp), lambda b, s: (b, 0)),
            scratch_shapes=[pltpu.VMEM((tB, H), jnp.float32)],
        ),
        compiler_params=pltpu.CompilerParams(
            dimension_semantics=("parallel", "arbitrary"),
            vmem_limit_bytes=vmem_limit,
        ),
        cost_estimate=cost,
    )(x, w0, b0_2d)

    return out_padded[:, :T]


def reference(hidden_states, w0, b0):
    pooled = jnp.max(hidden_states, axis=1)
    y = pooled @ w0 + b0
    mean = jnp.mean(y, axis=-1, keepdims=True)
    var = jnp.mean((y - mean) ** 2, axis=-1, keepdims=True)
    return (y - mean) / jnp.sqrt(var + LN_EPS)


if __name__ == "__main__":
    # Small, TPU-tile-friendly shapes consistent with the module:
    #   batch=16, seq=32, hidden_size=128, num_targets=128
    B, S, H, T = 16, 32, 128, 128

    key = jax.random.PRNGKey(0)
    k_x, k_w, k_b, k_x2 = jax.random.split(key, 4)

    # Synthetic "last hidden states" from the (not-reproduced) transformer.
    hidden_states = jax.random.normal(k_x, (B, S, H), dtype=jnp.float32)

    # Deterministic init of the module's own parameters (W_0: Linear(H, T)).
    bound = 1.0 / (H ** 0.5)
    w0 = jax.random.uniform(k_w, (H, T), minval=-bound, maxval=bound,
                            dtype=jnp.float32)
    b0 = jax.random.uniform(k_b, (T,), minval=-bound, maxval=bound,
                            dtype=jnp.float32)

    # Small tile target so the test exercises the (B-tile, S-tile) grid and the
    # running-max accumulator path (grid = (2, 4) here).
    small_tile = 8 * 8 * H * 4

    # Test 1: f32 streaming, dense T, tile-aligned S.
    out = jax.block_until_ready(
        transformer_encoder_head(hidden_states, w0, b0,
                                 target_tile_bytes=small_tile))
    ref = reference(hidden_states, w0, b0)
    assert out.shape == (B, T)
    assert jnp.allclose(out, ref, atol=1e-4, rtol=1e-4), "mismatch (f32 dense)"

    # Test 2: genuinely-bf16 hidden states (producer emits bf16 — no wrapper
    # cast), ragged S (in-kernel mask, no padding copy), T not a multiple of
    # 128 (masked LayerNorm stats).
    S2, T2 = 35, 100
    hs_bf16 = jax.random.normal(k_x2, (B, S2, H), dtype=jnp.float32
                                ).astype(jnp.bfloat16)
    out2 = jax.block_until_ready(
        transformer_encoder_head(hs_bf16, w0[:, :T2], b0[:T2],
                                 target_tile_bytes=small_tile))
    ref2 = reference(hs_bf16.astype(jnp.float32), w0[:, :T2], b0[:T2])
    assert out2.shape == (B, T2)
    assert jnp.allclose(out2, ref2, atol=2e-3, rtol=2e-3), \
        "mismatch (bf16 / ragged S / padded T)"

    print("KERNEL_OK")
</pallas_src>

<mosaic_0001>
module attributes {stable_mosaic.version = 11 : i64} {
  func.func @kernel(%arg0: i32, %arg1: i32, %arg2: memref<8x8x128xf32, #tpu.memory_space<vmem>>, %arg3: memref<128x128xf32, #tpu.memory_space<vmem>>, %arg4: memref<1x128xf32, #tpu.memory_space<vmem>>, %arg5: memref<8x128xf32, #tpu.memory_space<vmem>>, %arg6: memref<8x128xf32, #tpu.memory_space<vmem>>) attributes {dimension_semantics = [#tpu.dimension_semantics<parallel>, #tpu.dimension_semantics<arbitrary>], iteration_bounds = array<i64: 2, 4>, scalar_prefetch = 0 : i64, scratch_operands = 1 : i64, tpu.core_type = #tpu.core_type<tc>, window_params = [{transform_indices = @transform_0, window_bounds = array<i64: 8, 8, 128>}, {pipeline_mode = #tpu.pipeline_mode<synchronous>, transform_indices = @transform_1, window_bounds = array<i64: 128, 128>}, {pipeline_mode = #tpu.pipeline_mode<synchronous>, transform_indices = @transform_2, window_bounds = array<i64: 1, 128>}, {transform_indices = @transform_3, window_bounds = array<i64: 8, 128>}]} {
    %c0_i32 = arith.constant 0 : i32
    %0 = arith.cmpi eq, %arg1, %c0_i32 : i32
    %1 = arith.extui %0 : i1 to i32
    %c0_i32_0 = arith.constant 0 : i32
    %2 = arith.cmpi ne, %1, %c0_i32_0 : i32
    scf.if %2 {
      %cst_8 = arith.constant 0xFF800000 : f32
      %11 = vector.broadcast %cst_8 : f32 to vector<8x128xf32>
      %c0_9 = arith.constant 0 : index
      %c0_10 = arith.constant 0 : index
      %12 = vector.load %arg6[%c0_9, %c0_10] : memref<8x128xf32, #tpu.memory_space<vmem>>, vector<8x128xf32>
      tpu.vector_store %arg6[%c0_9, %c0_10], %11 {strides = array<i32>} : memref<8x128xf32, #tpu.memory_space<vmem>>, vector<8x128xf32>,
    } else {
    }
    %c0 = arith.constant 0 : index
    %c0_1 = arith.constant 0 : index
    %c0_2 = arith.constant 0 : index
    %3 = vector.load %arg2[%c0, %c0_1, %c0_2] : memref<8x8x128xf32, #tpu.memory_space<vmem>>, vector<8x8x128xf32>
    %cst = arith.constant dense<0xFF800000> : vector<8x128xf32>
    %4 = vector.multi_reduction <maximumf>, %3, %cst [1] : vector<8x8x128xf32> to vector<8x128xf32>
    %c0_3 = arith.constant 0 : index
    %c0_4 = arith.constant 0 : index
    %5 = vector.load %arg6[%c0_3, %c0_4] : memref<8x128xf32, #tpu.memory_space<vmem>>, vector<8x128xf32>
    %6 = arith.maximumf %5, %4 : vector<8x128xf32>
    %c0_5 = arith.constant 0 : index
    %c0_6 = arith.constant 0 : index
    %7 = vector.load %arg6[%c0_5, %c0_6] : memref<8x128xf32, #tpu.memory_space<vmem>>, vector<8x128xf32>
    tpu.vector_store %arg6[%c0_5, %c0_6], %6 {strides = array<i32>} : memref<8x128xf32, #tpu.memory_space<vmem>>, vector<8x128xf32>,
    %c3_i32 = arith.constant 3 : i32
    %8 = arith.cmpi eq, %arg1, %c3_i32 : i32
    %9 = arith.extui %8 : i1 to i32
    %c0_i32_7 = arith.constant 0 : i32
    %10 = arith.cmpi ne, %9, %c0_i32_7 : i32
    scf.if %10 {
      %c0_8 = arith.constant 0 : index
      %c0_9 = arith.constant 0 : index
      %11 = vector.load %arg6[%c0_8, %c0_9] : memref<8x128xf32, #tpu.memory_space<vmem>>, vector<8x128xf32>
      %c0_10 = arith.constant 0 : index
      %c0_11 = arith.constant 0 : index
      %12 = vector.load %arg3[%c0_10, %c0_11] : memref<128x128xf32, #tpu.memory_space<vmem>>, vector<128x128xf32>
      %cst_12 = arith.constant dense<0.000000e+00> : vector<8x128xf32>
      %13 = tpu.matmul %11, %12, %cst_12 {dimension_numbers = #tpu.dot_dimension_numbers<[1], [0], [0], [1], [0, 0, 1, 1], [], []>} : vector<8x128xf32>, vector<128x128xf32>, vector<8x128xf32> -> vector<8x128xf32>
      %c0_13 = arith.constant 0 : index
      %c0_14 = arith.constant 0 : index
      %14 = vector.load %arg4[%c0_13, %c0_14] : memref<1x128xf32, #tpu.memory_space<vmem>>, vector<1x128xf32>
      %15 = vector.broadcast %14 : vector<1x128xf32> to vector<8x128xf32>
      %16 = arith.addf %13, %15 : vector<8x128xf32>
      %cst_15 = arith.constant dense<0.000000e+00> : vector<8xf32>
      %17 = vector.multi_reduction <add>, %16, %cst_15 [1] : vector<8x128xf32> to vector<8xf32>
      %18 = vector.shape_cast %17 : vector<8xf32> to vector<8x1xf32>
      %cst_16 = arith.constant 1.280000e+02 : f32
      %19 = vector.broadcast %cst_16 : f32 to vector<8x1xf32>
      %20 = arith.divf %18, %19 : vector<8x1xf32>
      %21 = vector.broadcast %20 : vector<8x1xf32> to vector<8x128xf32>
      %22 = arith.subf %16, %21 : vector<8x128xf32>
      %23 = arith.mulf %22, %22 : vector<8x128xf32>
      %cst_17 = arith.constant dense<0.000000e+00> : vector<8xf32>
      %24 = vector.multi_reduction <add>, %23, %cst_17 [1] : vector<8x128xf32> to vector<8xf32>
      %25 = vector.shape_cast %24 : vector<8xf32> to vector<8x1xf32>
      %cst_18 = arith.constant 1.280000e+02 : f32
      %26 = vector.broadcast %cst_18 : f32 to vector<8x1xf32>
      %27 = arith.divf %25, %26 : vector<8x1xf32>
      %cst_19 = arith.constant 9.99999974E-6 : f32
      %28 = vector.broadcast %cst_19 : f32 to vector<8x1xf32>
      %29 = arith.addf %27, %28 : vector<8x1xf32>
      %30 = math.rsqrt %29 : vector<8x1xf32>
      %31 = vector.broadcast %30 : vector<8x1xf32> to vector<8x128xf32>
      %32 = arith.mulf %22, %31 : vector<8x128xf32>
      %c0_20 = arith.constant 0 : index
      %c0_21 = arith.constant 0 : index
      %33 = vector.load %arg5[%c0_20, %c0_21] : memref<8x128xf32, #tpu.memory_space<vmem>>, vector<8x128xf32>
      tpu.vector_store %arg5[%c0_20, %c0_21], %32 {strides = array<i32>} : memref<8x128xf32, #tpu.memory_space<vmem>>, vector<8x128xf32>,
    } else {
    }
    return
  }
  func.func @transform_0(%arg0: i32, %arg1: i32) -> (i32, i32, i32) {
    %c0_i32 = arith.constant 0 : i32
    %c0_i32_0 = arith.constant 0 : i32
    return %arg0, %arg1, %c0_i32 : i32, i32, i32
  }
  func.func @transform_1(%arg0: i32, %arg1: i32) -> (i32, i32) {
    %c0_i32 = arith.constant 0 : i32
    %c0_i32_0 = arith.constant 0 : i32
    %c0_i32_1 = arith.constant 0 : i32
    return %c0_i32, %c0_i32_0 : i32, i32
  }
  func.func @transform_2(%arg0: i32, %arg1: i32) -> (i32, i32) {
    %c0_i32 = arith.constant 0 : i32
    %c0_i32_0 = arith.constant 0 : i32
    %c0_i32_1 = arith.constant 0 : i32
    return %c0_i32, %c0_i32_0 : i32, i32
  }
  func.func @transform_3(%arg0: i32, %arg1: i32) -> (i32, i32) {
    %c0_i32 = arith.constant 0 : i32
    %c0_i32_0 = arith.constant 0 : i32
    return %arg0, %c0_i32 : i32, i32
  }
}

</mosaic_0001>

<llo_original>
// kernel: tpu_custom_call.1
$region0: #{tpu_custom_call.1}
  #allocation0 [shape = 'u32[]', space=smem, size = 0x4, offset = 0x4, fixed_abs, tag = 'smem constant byte address 0x4 - core index']
  #allocation1 [shape = 'u32[144,128]{1,0:T(1,128)}', space=vmem, size = 0x12000, scoped, tag = 'internal scratch']
  #allocation2 [shape = 'f32[8,128]{1,0:T(8,128)}', space=vmem, size = 0x1000, scoped, tag = 'scratch operand']
  %s0 = inlined_call_operand.hbm [shape: f32[16,32,128], index: 0, kind: input, shape index: {}]
  %s1 = inlined_call_operand.hbm [shape: f32[128,128], index: 1, kind: input, shape index: {}]
  %s2 = inlined_call_operand.vmem [shape: f32[1,128], index: 2, kind: input, shape index: {}]
  %s3 = inlined_call_operand.hbm [shape: f32[16,128], index: 3, kind: output, shape index: {}]
  %s4 = sld [smem:[#allocation0]]
  $region61: #{tpu_custom_call.1} parent=0
    _
  %s6 = ssub.s32 1, %s4
  %s7 = scalar_select 0, %s6, %s4
  $region1: #{tpu_custom_call.1} parent=0
    #allocation3 [shape = 'u8[65536]{0}', space=vmem, size = 0x10000, scoped, tag = 'input window, operand 0']
    #allocation4 [shape = 's32[2]{0}', space=sflag, size = 0x8, scoped, tag = 'scoped memory for tpu_custom_call.1']
    #allocation5 [shape = 's32[2]{0}', space=sflag, size = 0x8, scoped, tag = 'scoped memory for tpu_custom_call.1']
    #allocation6 [shape = 'u8[65536]{0}', space=vmem, size = 0x10000, scoped, tag = 'input window, operand 1, single buffered']
    #allocation7 [shape = 's32[1]{0}', space=sflag, size = 0x4, scoped, tag = 'scoped memory for tpu_custom_call.1']
    #allocation8 [shape = 'u8[8192]{0}', space=vmem, size = 0x2000, scoped, tag = 'output window, operand 0']
    %8 = vsyncpa [#allocation4], 0
    %s9 = scalar_lea.sflag [#allocation4], 1
    %10 = vsyncpa %s9, 0
    %11 = vsyncpa [#allocation7], 0
    %12 = vsyncpa [#allocation5], 0
    %s13 = scalar_lea.sflag [#allocation5], 1
    %14 = vsyncpa %s13, 0
    loop: start=0, step=1, limit=10
    $region2: #{tpu_custom_call.1} parent=1 // loop_pre_header
      _
    $region3: #{tpu_custom_call.1} parent=1 // loop_header
      %s16 = sphi 0, %s20
      %p17 = scmp.ge.s32.totalorder %s16, 10
      %s23 = sphi 0, %s35
      %s24 = sphi 0, %s31
      %s25 = sphi 0, %s23
      %s26 = sphi 0, %s24
      %s27 = sphi 0, %s25
      %s28 = sphi 0, %s26
      %s40 = sphi 0, %s42
      %s43 = sphi 0, %s40
      %s44 = sphi 0, %s43
      %s60 = sphi 0, %s44
      %s64 = sphi 0, %s64
      %s66 = sphi 0, %s64
      %s67 = sphi 0, %s66
      %s81 = sphi 0, %s67
      %s85 = sphi 0, %s85
      %s87 = sphi 0, %s85
      %s88 = sphi 0, %s87
      %s102 = sphi 0, %s88
      %s108 = sphi 0, %s110
      %s111 = sphi 0, %s108
      %s112 = sphi 0, %s111
      %s128 = sphi 0, %s112
    $region4: #{tpu_custom_call.1} parent=1 // loop_header_branch
      %19 = sbr.rel (%p17) target = $region8
    $region5: #{tpu_custom_call.1} parent=1 // loop_body
      %s21 = ssub.s32 %s16, 1
      %s22 = ssub.s32 %s16, 2
      %s29 = sadd.s32 1, %s24
      %p30 = scmp.ge.s32.totalorder %s29, 4
      %s31 = scalar_select %p30, 0, %s29
      %s32 = sadd.s32 1, %s23
      %s33 = scalar_select %p30, %s32, %s23
      %p34 = scmp.ge.s32.totalorder %s33, 2
      %s35 = scalar_select %p34, 0, %s33
      %s36 = ssub.s32 %s23, %s35
      %s37 = ssub.s32 %s24, %s31
      %s38 = sor.u32 %s36, %s37
      %p39 = scmp.eq.s32.totalorder %s38, 0
      %s41 = sadd.s32 %s40, 1
      %s42 = scalar_select %p39, %s40, %s41
      %p45 = pneg %p39
      %p46 = scmp.eq.s32.totalorder %s16, 7
      %p47 = por %p45, %p46
      %p48 = scmp.ne.s32.totalorder %s40, %s43
      %p49 = scmp.eq.s32.totalorder %s16, 0
      %p50 = por %p48, %p49
      %p51 = scmp.ne.s32.totalorder %s40, %s43
      %p52 = scmp.eq.s32.totalorder %s21, 7
      %p53 = por %p51, %p52
      %p54 = scmp.ne.s32.totalorder %s43, %s44
      %p55 = scmp.eq.s32.totalorder %s21, 0
      %p56 = por %p54, %p55
      %p57 = scmp.ne.s32.totalorder %s43, %s44
      %p58 = scmp.eq.s32.totalorder %s22, 7
      %p59 = por %p57, %p58
      %p61 = scmp.ne.s32.totalorder %s44, %s60
      %p62 = scmp.eq.s32.totalorder %s22, 0
      %p63 = por %p61, %p62
      %s65 = sadd.s32 %s64, 1
      %p68 = scmp.eq.s32.totalorder %s16, 7
      %p69 = scmp.ne.s32.totalorder %s64, %s66
      %p70 = scmp.eq.s32.totalorder %s16, 0
      %p71 = por %p69, %p70
      %p72 = scmp.ne.s32.totalorder %s64, %s66
      %p73 = scmp.eq.s32.totalorder %s21, 7
      %p74 = por %p72, %p73
      %p75 = scmp.ne.s32.totalorder %s66, %s67
      %p76 = scmp.eq.s32.totalorder %s21, 0
      %p77 = por %p75, %p76
      %p78 = scmp.ne.s32.totalorder %s66, %s67
      %p79 = scmp.eq.s32.totalorder %s22, 7
      %p80 = por %p78, %p79
      %p82 = scmp.ne.s32.totalorder %s67, %s81
      %p83 = scmp.eq.s32.totalorder %s22, 0
      %p84 = por %p82, %p83
      %s86 = sadd.s32 %s85, 1
      %p89 = scmp.eq.s32.totalorder %s16, 7
      %p90 = scmp.ne.s32.totalorder %s85, %s87
      %p91 = scmp.eq.s32.totalorder %s16, 0
      %p92 = por %p90, %p91
      %p93 = scmp.ne.s32.totalorder %s85, %s87
      %p94 = scmp.eq.s32.totalorder %s21, 7
      %p95 = por %p93, %p94
      %p96 = scmp.ne.s32.totalorder %s87, %s88
      %p97 = scmp.eq.s32.totalorder %s21, 0
      %p98 = por %p96, %p97
      %p99 = scmp.ne.s32.totalorder %s87, %s88
      %p100 = scmp.eq.s32.totalorder %s22, 7
      %p101 = por %p99, %p100
      %p103 = scmp.ne.s32.totalorder %s88, %s102
      %p104 = scmp.eq.s32.totalorder %s22, 0
      %p105 = por %p103, %p104
      %s106 = ssub.s32 %s23, %s35
      %p107 = scmp.eq.s32.totalorder %s106, 0
      %s109 = sadd.s32 %s108, 1
      %s110 = scalar_select %p107, %s108, %s109
      %p113 = pneg %p107
      %p114 = scmp.eq.s32.totalorder %s16, 7
      %p115 = por %p113, %p114
      %p116 = scmp.ne.s32.totalorder %s108, %s111
      %p117 = scmp.eq.s32.totalorder %s16, 0
      %p118 = por %p116, %p117
      %p119 = scmp.ne.s32.totalorder %s108, %s111
      %p120 = scmp.eq.s32.totalorder %s21, 7
      %p121 = por %p119, %p120
      %p122 = scmp.ne.s32.totalorder %s111, %s112
      %p123 = scmp.eq.s32.totalorder %s21, 0
      %p124 = por %p122, %p123
      %p125 = scmp.ne.s32.totalorder %s111, %s112
      %p126 = scmp.eq.s32.totalorder %s22, 7
      %p127 = por %p125, %p126
      %p129 = scmp.ne.s32.totalorder %s112, %s128
      %p130 = scmp.eq.s32.totalorder %s22, 0
      %p131 = por %p129, %p130
      %p132 = scmp.le.s32.totalorder 1, %s16
      %p133 = scmp.lt.s32.totalorder %s16, 9
      %p134 = pnand %p132, %p133
      %p135 = pneg %p134
      // Predicated region
      $region9: #{tpu_custom_call.1} parent=5 // pred_check
        _
      $region10: #{tpu_custom_call.1} parent=5 // pred_check_branch
        %137 = sbr.rel (%p134) target = $region12
      $region11: #{tpu_custom_call.1} parent=5 // pred_region
        %s138 = ssub.s32 %s16, 1
        // Predicated region
        $region13: #{tpu_custom_call.1} parent=11 // pred_check
          %p139 = pneg %p77
        $region14: #{tpu_custom_call.1} parent=11 // pred_check_branch
          %141 = sbr.rel (%p139) target = $region16
        $region15: #{tpu_custom_call.1} parent=11 // pred_region
          %s143 = ssub.s32 2048, 2048
          %144 = vsyncadd [#allocation7], %s143
          %s145 = sshll.u32 [#allocation6], 4
          %s146 = int_to_ptr.vmem [resolvable:$true] %s145
          %151 = dma.hbm_to_vmem [thread:$0]  %s1, 2048, %s146, [#allocation7], 128, 128, 8
        $region16: #{tpu_custom_call.1} parent=11 // pred_fallthru
          _
        // Predicated region
        $region17: #{tpu_custom_call.1} parent=11 // pred_check
          %p152 = pneg %p98
        $region18: #{tpu_custom_call.1} parent=11 // pred_check_branch
          %154 = sbr.rel (%p152) target = $region20
        $region19: #{tpu_custom_call.1} parent=11 // pred_region
          _
        $region20: #{tpu_custom_call.1} parent=11 // pred_fallthru
          _
      $region12: #{tpu_custom_call.1} parent=5 // pred_fallthru
        _
      %p155 = scmp.lt.s32.totalorder %s16, 8
      // Predicated region
      $region21: #{tpu_custom_call.1} parent=5 // pred_check
        %p156 = pneg %p155
      $region22: #{tpu_custom_call.1} parent=5 // pred_check_branch
        %158 = sbr.rel (%p156) target = $region24
      $region23: #{tpu_custom_call.1} parent=5 // pred_region
        // Predicated region
        $region25: #{tpu_custom_call.1} parent=23 // pred_check
          %p159 = pneg %p50
        $region26: #{tpu_custom_call.1} parent=23 // pred_check_branch
          %161 = sbr.rel (%p159) target = $region28
        $region27: #{tpu_custom_call.1} parent=23 // pred_region
          %s162 = sand.u32 %s40, 1
          %s163 = scalar_lea.sflag [#allocation4], %s162
          %s164 = sand.u32 %s40, 1
          %s165 = smul.addr %s164, 64
          %s166 = scalar_lea.vmem [#allocation3], %s165
          %s167 = smul.u32 8, %s23
          %s169 = ssub.s32 1024, 1024
          %170 = vsyncadd %s163, %s169
          %s171 = smul.addr %s167, 4
          %s172 = sadd.s32 %s24, %s171
          %s173 = smul.addr %s172, 128
          %s174 = scalar_lea.hbm %s0, %s173
          %s175 = sshll.u32 %s166, 4
          %s176 = int_to_ptr.vmem [resolvable:$true] %s175
          %181 = dma.hbm_to_vmem [thread:$0]  %s174, 1024, %s176, %s163, 512, 128, 8
        $region28: #{tpu_custom_call.1} parent=23 // pred_fallthru
          _
      $region24: #{tpu_custom_call.1} parent=5 // pred_fallthru
        _
      %p182 = scmp.le.s32.totalorder 1, %s16
      %p183 = scmp.lt.s32.totalorder %s16, 9
      %p184 = pnand %p182, %p183
      %p185 = pneg %p184
      // Predicated region
      $region29: #{tpu_custom_call.1} parent=5 // pred_check
        _
      $region30: #{tpu_custom_call.1} parent=5 // pred_check_branch
        %187 = sbr.rel (%p184) target = $region32
      $region31: #{tpu_custom_call.1} parent=5 // pred_region
        %s188 = ssub.s32 %s16, 1
        %s189 = sand.u32 %s43, 1
        %s190 = scalar_lea.sflag [#allocation4], %s189
        %s191 = sand.u32 %s43, 1
        %s192 = smul.addr %s191, 64
        %s193 = scalar_lea.vmem [#allocation3], %s192
        // Predicated region
        $region33: #{tpu_custom_call.1} parent=31 // pred_check
          %p194 = pneg %p56
        $region34: #{tpu_custom_call.1} parent=31 // pred_check_branch
          %196 = sbr.rel (%p194) target = $region36
        $region35: #{tpu_custom_call.1} parent=31 // pred_region
          %197 = dma.done %s190, 1024
        $region36: #{tpu_custom_call.1} parent=31 // pred_fallthru
          _
        // Predicated region
        $region37: #{tpu_custom_call.1} parent=31 // pred_check
          %p198 = pneg %p77
        $region38: #{tpu_custom_call.1} parent=31 // pred_check_branch
          %200 = sbr.rel (%p198) target = $region40
        $region39: #{tpu_custom_call.1} parent=31 // pred_region
          %201 = dma.done [#allocation7], 2048
        $region40: #{tpu_custom_call.1} parent=31 // pred_fallthru
          _
        %s202 = sand.u32 %s43, 1
        %s203 = scalar_lea.sflag [#allocation4], %s202
        %s204 = sand.u32 %s43, 1
        %s205 = smul.addr %s204, 64
        %s206 = scalar_lea.vmem [#allocation3], %s205
        %p207 = pneg %p56
        %p208 = pneg %p53
        %p209 = pneg %p77
        %p210 = pneg %p74
        %p211 = pneg %p98
        %p212 = pneg %p95
        %p213 = pneg %p124
        %p214 = pneg %p121
        %s215 = sand.u32 %s111, 1
        %s216 = scalar_lea.sflag [#allocation5], %s215
        %s217 = sand.u32 %s111, 1
        %s218 = smul.addr %s217, 8
        %s219 = scalar_lea.vmem [#allocation8], %s218
        %s220 = smul.u32 8, %s25
        %p221 = scmp.eq.s32.totalorder %s26, 0
        // Predicated region
        $region41: #{tpu_custom_call.1} parent=31 // pred_check
          %p222 = pneg %p221
        $region42: #{tpu_custom_call.1} parent=31 // pred_check_branch
          %224 = sbr.rel (%p222) target = $region44
        $region43: #{tpu_custom_call.1} parent=31 // pred_region
          %225 = vst [vmem:[#allocation2] sm:$0xff] -inf
        $region44: #{tpu_custom_call.1} parent=31 // pred_fallthru
          _
        %v226 = vld [vmem:[%s193] sm:$0xff]
        %v227 = vld [vmem:[%s193 + $0x8] sm:$0xff]
        %v228 = vld [vmem:[%s193 + $0x10] sm:$0xff]
        %v229 = vld [vmem:[%s193 + $0x18] sm:$0xff]
        %v230 = vld [vmem:[%s193 + $0x20] sm:$0xff]
        %v231 = vld [vmem:[%s193 + $0x28] sm:$0xff]
        %v232 = vld [vmem:[%s193 + $0x30] sm:$0xff]
        %v233 = vld [vmem:[%s193 + $0x38] sm:$0xff]
        %v234 = vrot.slane %v226, 4
        %v235 = vmax.f32 %v226, %v234
        %v236 = vrot.slane %v235, 2
        %v237 = vmax.f32 %v235, %v236
        %v238 = vrot.slane %v237, 1
        %v239 = vmax.f32 %v237, %v238
        %v240 = vrot.slane %v227, 4
        %v241 = vmax.f32 %v227, %v240
        %v242 = vrot.slane %v241, 2
        %v243 = vmax.f32 %v241, %v242
        %v244 = vrot.slane %v243, 1
        %v245 = vmax.f32 %v243, %v244
        %v246 = vrot.slane %v228, 4
        %v247 = vmax.f32 %v228, %v246
        %v248 = vrot.slane %v247, 2
        %v249 = vmax.f32 %v247, %v248
        %v250 = vrot.slane %v249, 1
        %v251 = vmax.f32 %v249, %v250
        %v252 = vrot.slane %v229, 4
        %v253 = vmax.f32 %v229, %v252
        %v254 = vrot.slane %v253, 2
        %v255 = vmax.f32 %v253, %v254
        %v256 = vrot.slane %v255, 1
        %v257 = vmax.f32 %v255, %v256
        %v258 = vrot.slane %v230, 4
        %v259 = vmax.f32 %v230, %v258
        %v260 = vrot.slane %v259, 2
        %v261 = vmax.f32 %v259, %v260
        %v262 = vrot.slane %v261, 1
        %v263 = vmax.f32 %v261, %v262
        %v264 = vrot.slane %v231, 4
        %v265 = vmax.f32 %v231, %v264
        %v266 = vrot.slane %v265, 2
        %v267 = vmax.f32 %v265, %v266
        %v268 = vrot.slane %v267, 1
        %v269 = vmax.f32 %v267, %v268
        %v270 = vrot.slane %v232, 4
        %v271 = vmax.f32 %v232, %v270
        %v272 = vrot.slane %v271, 2
        %v273 = vmax.f32 %v271, %v272
        %v274 = vrot.slane %v273, 1
        %v275 = vmax.f32 %v273, %v274
        %v276 = vrot.slane %v233, 4
        %v277 = vmax.f32 %v233, %v276
        %v278 = vrot.slane %v277, 2
        %v279 = vmax.f32 %v277, %v278
        %v280 = vrot.slane %v279, 1
        %v281 = vmax.f32 %v279, %v280
        %v282 = vld [vmem:[#allocation2] sm:$0xff]
        %vm291 = vcmask 1041409
        %v292 = vsel %vm291, %v245, %v239
        %vm293 = vcmask 1042434
        %v294 = vsel %vm293, %v251, %v292
        %vm295 = vcmask 1043459
        %v296 = vsel %vm295, %v257, %v294
        %vm297 = vcmask 1044484
        %v298 = vsel %vm297, %v263, %v296
        %vm299 = vcmask 1045509
        %v300 = vsel %vm299, %v269, %v298
        %vm301 = vcmask 1046534
        %v302 = vsel %vm301, %v275, %v300
        %vm303 = vcmask 1047559
        %v304 = vsel %vm303, %v281, %v302
        %v306 = vmax.f32 %v282, %v304
        %307 = vst [vmem:[#allocation2] sm:$0xff] %v306
        %p308 = scmp.eq.s32.totalorder %s26, 3
        // Predicated region
        $region45: #{tpu_custom_call.1} parent=31 // pred_check
          %p309 = pneg %p308
        $region46: #{tpu_custom_call.1} parent=31 // pred_check_branch
          %311 = sbr.rel (%p309) target = $region48
        $region47: #{tpu_custom_call.1} parent=31 // pred_region
          %v312 = vld [vmem:[#allocation2] sm:$0xff]
          %v313 = vld [vmem:[#allocation6] sm:$0xff]
          %v314 = vld [vmem:[#allocation6 + $0x8] sm:$0xff]
          %v315 = vld [vmem:[#allocation6 + $0x10] sm:$0xff]
          %v316 = vld [vmem:[#allocation6 + $0x18] sm:$0xff]
          %v317 = vld [vmem:[#allocation6 + $0x20] sm:$0xff]
          %v318 = vld [vmem:[#allocation6 + $0x28] sm:$0xff]
          %v319 = vld [vmem:[#allocation6 + $0x30] sm:$0xff]
          %v320 = vld [vmem:[#allocation6 + $0x38] sm:$0xff]
          %v321 = vld [vmem:[#allocation6 + $0x40] sm:$0xff]
          %v322 = vld [vmem:[#allocation6 + $0x48] sm:$0xff]
          %v323 = vld [vmem:[#allocation6 + $0x50] sm:$0xff]
          %v324 = vld [vmem:[#allocation6 + $0x58] sm:$0xff]
          %v325 = vld [vmem:[#allocation6 + $0x60] sm:$0xff]
          %v326 = vld [vmem:[#allocation6 + $0x68] sm:$0xff]
          %v327 = vld [vmem:[#allocation6 + $0x70] sm:$0xff]
          %v328 = vld [vmem:[#allocation6 + $0x78] sm:$0xff]
          %v329 = vld [vmem:[%s2] sm:$0x1]
          %v331 = vlaneseq
          %v332 = vshrl.u32 %v331, 7
          %v333 = vsub.s32 0, %v332
          %v334 = vrot.slane %v329, %v333
          %336 = vmatprep.subr.mxu0 0.0
          %337 = vmatpush1.msra.mxu0 %v313
          %338 = vmatprep.subr.mxu0 0.0
          %339 = vmatpush1.msra.mxu0 %v314
          %340 = vmatprep.subr.mxu0 0.0
          %341 = vmatpush1.msra.mxu0 %v315
          %342 = vmatprep.subr.mxu0 0.0
          %343 = vmatpush1.msra.mxu0 %v316
          %344 = vmatprep.subr.mxu0 0.0
          %345 = vmatpush1.msra.mxu0 %v317
          %346 = vmatprep.subr.mxu0 0.0
          %347 = vmatpush1.msra.mxu0 %v318
          %348 = vmatprep.subr.mxu0 0.0
          %349 = vmatpush1.msra.mxu0 %v319
          %350 = vmatprep.subr.mxu0 0.0
          %351 = vmatpush1.msra.mxu0 %v320
          %352 = vmatprep.subr.mxu0 0.0
          %353 = vmatpush1.msra.mxu0 %v321
          %354 = vmatprep.subr.mxu0 0.0
          %355 = vmatpush1.msra.mxu0 %v322
          %356 = vmatprep.subr.mxu0 0.0
          %357 = vmatpush1.msra.mxu0 %v323
          %358 = vmatprep.subr.mxu0 0.0
          %359 = vmatpush1.msra.mxu0 %v324
          %360 = vmatprep.subr.mxu0 0.0
          %361 = vmatpush1.msra.mxu0 %v325
          %362 = vmatprep.subr.mxu0 0.0
          %363 = vmatpush1.msra.mxu0 %v326
          %364 = vmatprep.subr.mxu0 0.0
          %365 = vmatpush1.msra.mxu0 %v327
          %366 = vmatprep.subr.mxu0 0.0
          %367 = vmatpush1.msra.mxu0 %v328
          %368 = vmatprep.subr.mxu0 0.0
          %369 = vmatpush1.msra.mxu0 0.0
          %370 = vmatprep.subr.mxu0 0.0
          %371 = vmatpush1.msra.mxu0 0.0
          %372 = vmatprep.subr.mxu0 0.0
          %373 = vmatpush1.msra.mxu0 0.0
          %374 = vmatprep.subr.mxu0 0.0
          %375 = vmatpush1.msra.mxu0 0.0
          %376 = vmatprep.subr.mxu0 0.0
          %377 = vmatpush1.msra.mxu0 0.0
          %378 = vmatprep.subr.mxu0 0.0
          %379 = vmatpush1.msra.mxu0 0.0
          %380 = vmatprep.subr.mxu0 0.0
          %381 = vmatpush1.msra.mxu0 0.0
          %382 = vmatprep.subr.mxu0 0.0
          %383 = vmatpush1.msra.mxu0 0.0
          %384 = vmatprep.subr.mxu0 0.0
          %385 = vmatpush1.msra.mxu0 0.0
          %386 = vmatprep.subr.mxu0 0.0
          %387 = vmatpush1.msra.mxu0 0.0
          %388 = vmatprep.subr.mxu0 0.0
          %389 = vmatpush1.msra.mxu0 0.0
          %390 = vmatprep.subr.mxu0 0.0
          %391 = vmatpush1.msra.mxu0 0.0
          %392 = vmatprep.subr.mxu0 0.0
          %393 = vmatpush1.msra.mxu0 0.0
          %394 = vmatprep.subr.mxu0 0.0
          %395 = vmatpush1.msra.mxu0 0.0
          %396 = vmatprep.subr.mxu0 0.0
          %397 = vmatpush1.msra.mxu0 0.0
          %398 = vmatprep.subr.mxu0 0.0
          %399 = vmatpush1.msra.mxu0 0.0
          %400 = vmatprep.mubr.f32.mxu0 0.0
          %401 = vmatmul.mubr.f32.gmra.mrb[0].mxu0 %v312
          %v402 = vpop.f32.mrb[0].mxu0
          %v403 = vadd.f32 %v334, %v402
          %v404 = vpop.f32.mrb[0].mxu0
          %405 = vdwg.mxu0
          %406 = vadd.xlane.f32.xlu0 %v403
          %v407 = vpop.xlane.xlu0 %406
          %v408 = vrcp.pop 128.0
          %v409 = vmul.f32 %v407, %v408
          %v410 = vsub.f32 %v403, %v409
          %v411 = vmul.f32 %v410, %v410
          %412 = vadd.xlane.f32.xlu0 %v411
          %v413 = vpop.xlane.xlu0 %412
          %v414 = vmul.f32 %v413, %v408
          %v415 = vadd.f32 %v414, 1e-05
          %v416 = vrsqrt.pop %v415
          %v417 = vmul.f32 %v410, %v416
          %418 = vst [vmem:[%s219] sm:$0xff] %v417
        $region48: #{tpu_custom_call.1} parent=31 // pred_fallthru
          _
        %s419 = sand.u32 %s111, 1
        %s420 = scalar_lea.sflag [#allocation5], %s419
        %s421 = sand.u32 %s111, 1
        %s422 = smul.addr %s421, 8
        %s423 = scalar_lea.vmem [#allocation8], %s422
        // Predicated region
        $region49: #{tpu_custom_call.1} parent=31 // pred_check
          %p424 = pneg %p121
        $region50: #{tpu_custom_call.1} parent=31 // pred_check_branch
          %426 = sbr.rel (%p424) target = $region52
        $region51: #{tpu_custom_call.1} parent=31 // pred_region
          %s428 = ssub.s32 128, 128
          %429 = vsyncadd %s420, %s428
          %s430 = smul.addr %s25, 128
          %s431 = scalar_lea.hbm %s3, %s430
          %s433 = sshll.u32 %s423, 4
          %s434 = int_to_ptr.vmem [resolvable:$true] %s433
          %436 = dma.vmem_to_hbm [thread:$0]  %s434, 128, %s431, %s420
        $region52: #{tpu_custom_call.1} parent=31 // pred_fallthru
          _
      $region32: #{tpu_custom_call.1} parent=5 // pred_fallthru
        _
      %p437 = scmp.le.s32.totalorder 2, %s16
      // Predicated region
      $region53: #{tpu_custom_call.1} parent=5 // pred_check
        %p438 = pneg %p437
      $region54: #{tpu_custom_call.1} parent=5 // pred_check_branch
        %440 = sbr.rel (%p438) target = $region56
      $region55: #{tpu_custom_call.1} parent=5 // pred_region
        %s441 = ssub.s32 %s16, 2
        // Predicated region
        $region57: #{tpu_custom_call.1} parent=55 // pred_check
          %p442 = pneg %p127
        $region58: #{tpu_custom_call.1} parent=55 // pred_check_branch
          %444 = sbr.rel (%p442) target = $region60
        $region59: #{tpu_custom_call.1} parent=55 // pred_region
          %s445 = sand.u32 %s112, 1
          %s446 = scalar_lea.sflag [#allocation5], %s445
          %s447 = sand.u32 %s112, 1
          %s448 = smul.addr %s447, 8
          %s449 = scalar_lea.vmem [#allocation8], %s448
          %450 = dma.done %s446, 128
        $region60: #{tpu_custom_call.1} parent=55 // pred_fallthru
          _
      $region56: #{tpu_custom_call.1} parent=5 // pred_fallthru
        _
    $region6: #{tpu_custom_call.1} parent=1 // loop_footer
      %s20 = sadd.s32 1, %s16
    $region7: #{tpu_custom_call.1} parent=1 // loop_footer_branch
      %15 = sbr.rel target = $region3
    $region8: #{tpu_custom_call.1} parent=1 // loop_exit
      _
    %451 = vsyncpa [#allocation4], 1
    %s452 = scalar_lea.sflag [#allocation4], 1
    %453 = vsyncpa %s452, 1
    %454 = vsyncpa [#allocation7], 1
    %455 = vsyncpa [#allocation5], 1
    %s456 = scalar_lea.sflag [#allocation5], 1
    %457 = vsyncpa %s456, 1

</llo_original>
